<compile_context>
chip_gen: v6e
topology: v6e:2x2x1
jax: 0.10.0
libtpu: 0.0.40
codegen_flags: <defaults>
</compile_context>

<pallas_src>
import jax
import jax.numpy as jnp
from jax.experimental import pallas as pl
from jax.experimental.pallas import tpu as pltpu


def _row_tile(n_pad):
    """Largest row-tile (multiple of 8, <=1024) that divides the padded batch."""
    for t in (1024, 512, 256, 128, 64, 32, 16, 8):
        if n_pad % t == 0:
            return t
    return n_pad


def _branching_kernel(inv_t_ref, gidx_ref, eps_ref, logp_ref, out_ref):
    # inv_t_ref: (1,)        f32  SMEM  -- 1 / annealed temperature
    # gidx_ref:  (tile_n, 1) i32  VMEM  -- group-row index per sample
    # eps_ref:   (tile_n, B) f32  VMEM  -- pre-drawn Gumbel noise
    # logp_ref:  (G, B)      f32  VMEM  -- log of per-group branch parameters
    # out_ref:   (tile_n, B) f32  VMEM  -- normalized branch weights
    G = logp_ref.shape[0]
    gidx = gidx_ref[...]  # (tile_n, 1)

    # Gather each sample's group row with an unrolled VPU select chain
    # (exact selection; avoids a padded MXU matmul and per-sample logs).
    logits = jnp.zeros(out_ref.shape, dtype=jnp.float32)
    for g in range(G):
        row = logp_ref[pl.ds(g, 1), :]          # (1, B)
        logits = jnp.where(gidx == g, row, logits)

    inv_t = inv_t_ref[0]
    z = (logits + eps_ref[...]) * inv_t
    # Subtract the per-row max before exp: exact after normalization, and
    # prevents overflow for small t / extreme Gumbel draws.
    z = z - jnp.max(z, axis=1, keepdims=True)
    e = jnp.exp(z)
    out_ref[...] = e / jnp.sum(e, axis=1, keepdims=True)


def branching_forward(inv_t, gidx, eps, logp):
    """inv_t: (1,) f32; gidx: (Np, 1) i32; eps: (Np, B) f32; logp: (G, B) f32."""
    n_pad, one = gidx.shape
    assert one == 1 and n_pad % 8 == 0
    G, B = logp.shape
    tile_n = _row_tile(n_pad)
    grid = (n_pad // tile_n,)
    return pl.pallas_call(
        _branching_kernel,
        out_shape=jax.ShapeDtypeStruct((n_pad, B), jnp.float32),
        grid=grid,
        in_specs=[
            pl.BlockSpec((1,), lambda i: (0,),
                         memory_space=pltpu.MemorySpace.SMEM),     # 1/t
            pl.BlockSpec((tile_n, 1), lambda i: (i, 0)),           # group idx
            pl.BlockSpec((tile_n, B), lambda i: (i, 0)),           # gumbel eps
            pl.BlockSpec((G, B), lambda i: (0, 0)),                # log-probs
        ],
        out_specs=pl.BlockSpec((tile_n, B), lambda i: (i, 0)),
        compiler_params=pltpu.CompilerParams(
            dimension_semantics=("parallel",)),
    )(inv_t, gidx, eps, logp)


@jax.jit
def _branching_apply(probs, gidx, key, inv_t):
    """probs: (G, B) f32; gidx: (N, 1) i32; key: PRNG key; inv_t: (1,) f32."""
    N = gidx.shape[0]
    B = probs.shape[1]
    # log() once on the tiny (G, B) parameter table (not per-sample).
    logp = jnp.log(probs)
    # Gumbel noise eps = -log(-log(U)), U ~ Uniform(0, 1).
    u = jax.random.uniform(key, (N, B), dtype=jnp.float32,
                           minval=1e-12, maxval=1.0)
    eps = -jnp.log(-jnp.log(u))
    # Pad rows to a multiple of 8 for the (8, 128)-aligned row tiles.
    n_pad = -(-N // 8) * 8
    if n_pad != N:
        gidx = jnp.pad(gidx, ((0, n_pad - N), (0, 0)))
        eps = jnp.pad(eps, ((0, n_pad - N), (0, 0)))
    out = branching_forward(inv_t, gidx, eps, logp)
    return out[:N]


class Branching:
    """JAX/Pallas port of the PyTorch `branching` module."""

    def __init__(self, groups, num_branches, seed=0):
        self.num_branches = num_branches
        self.t = 10.0
        # 'student_<id>' -> group node, same key parsing as the torch module.
        self.groups = {s.split("_")[1]: groups[s] for s in groups}
        group_nodes = sorted(set(groups.values()))
        self.group_to_row = {g: i for i, g in enumerate(group_nodes)}
        # Deterministic parameter init: ones(num_branches) per group,
        # identical to nn.Parameter(torch.ones(num_branches)).
        self.probabilities = jnp.ones(
            (len(group_nodes), num_branches), dtype=jnp.float32)
        self._key = jax.random.PRNGKey(seed)
        self._gidx_cache = {}

    def _gidx_for(self, ids):
        key = tuple(ids)
        g = self._gidx_cache.get(key)
        if g is None:
            g = jnp.array(
                [self.group_to_row[self.groups[i]] for i in ids],
                dtype=jnp.int32,
            ).reshape(-1, 1)
            self._gidx_cache[key] = g
        return g

    def __call__(self, x, ids, key=None):
        # Temperature anneal is Python-side state (same as the torch module).
        # TODO(synk): not jit/vmap-safe; t is consumed as a runtime array only.
        if self.t > 0.5:
            self.t *= 0.98
        N = x.shape[0]
        assert len(ids) == N
        gidx = self._gidx_for(ids)
        if key is None:
            # Fresh Gumbel noise on every call, like torch.rand per forward.
            self._key, key = jax.random.split(self._key)
        inv_t = jnp.array([1.0 / self.t], dtype=jnp.float32)
        return _branching_apply(self.probabilities, gidx, key, inv_t)


if __name__ == "__main__":
    key = jax.random.PRNGKey(0)

    groups = {
        "student_a": "g0",
        "student_b": "g1",
        "student_c": "g2",
        "student_d": "g0",
    }
    num_branches = 4
    mod = Branching(groups, num_branches, seed=0)

    N = 8
    x = jax.random.normal(key, (N, 4, 16, 16), dtype=jnp.float32)
    ids = ["a", "b", "c", "d", "a", "b", "c", "d"]

    out = mod(x, ids)
    out = jax.block_until_ready(out)

    assert out.shape == (N, num_branches), out.shape
    assert bool(jnp.all(jnp.isfinite(out)))
    assert bool(jnp.all(out >= 0.0))
    assert bool(jnp.allclose(jnp.sum(out, axis=1), 1.0, atol=1e-5))
    print("KERNEL_OK")
</pallas_src>

<mosaic_0001>
module attributes {stable_mosaic.version = 11 : i64} {
  func.func @_branching_kernel(%arg0: i32, %arg1: memref<1xf32, #tpu.memory_space<smem>>, %arg2: memref<8x1xi32, #tpu.memory_space<vmem>>, %arg3: memref<8x4xf32, #tpu.memory_space<vmem>>, %arg4: memref<3x4xf32, #tpu.memory_space<vmem>>, %arg5: memref<8x4xf32, #tpu.memory_space<vmem>>) attributes {dimension_semantics = [#tpu.dimension_semantics<parallel>], iteration_bounds = array<i64: 1>, scalar_prefetch = 0 : i64, scratch_operands = 0 : i64, tpu.core_type = #tpu.core_type<tc>, window_params = [{transform_indices = @transform_0, window_bounds = array<i64: 1>}, {transform_indices = @transform_1, window_bounds = array<i64: 8, 1>}, {transform_indices = @transform_2, window_bounds = array<i64: 8, 4>}, {pipeline_mode = #tpu.pipeline_mode<synchronous>, transform_indices = @transform_3, window_bounds = array<i64: 3, 4>}, {transform_indices = @transform_4, window_bounds = array<i64: 8, 4>}]} {
    %c0 = arith.constant 0 : index
    %c0_0 = arith.constant 0 : index
    %0 = vector.load %arg2[%c0, %c0_0] : memref<8x1xi32, #tpu.memory_space<vmem>>, vector<8x1xi32>
    %cst = arith.constant 0.000000e+00 : f32
    %1 = vector.broadcast %cst : f32 to vector<8x4xf32>
    %c0_1 = arith.constant 0 : index
    %c0_2 = arith.constant 0 : index
    %2 = vector.load %arg4[%c0_1, %c0_2] : memref<3x4xf32, #tpu.memory_space<vmem>>, vector<1x4xf32>
    %c0_i32 = arith.constant 0 : i32
    %3 = vector.broadcast %c0_i32 : i32 to vector<8x1xi32>
    %4 = arith.cmpi eq, %0, %3 : vector<8x1xi32>
    %5 = vector.shape_cast %4 : vector<8x1xi1> to vector<8x1xi1>
    %6 = vector.broadcast %5 : vector<8x1xi1> to vector<8x4xi1>
    %7 = vector.shape_cast %2 : vector<1x4xf32> to vector<1x4xf32>
    %8 = vector.broadcast %7 : vector<1x4xf32> to vector<8x4xf32>
    %9 = arith.select %6, %8, %1 : vector<8x4xi1>, vector<8x4xf32>
    %c1 = arith.constant 1 : index
    %c0_3 = arith.constant 0 : index
    %10 = vector.load %arg4[%c1, %c0_3] : memref<3x4xf32, #tpu.memory_space<vmem>>, vector<1x4xf32>
    %c1_i32 = arith.constant 1 : i32
    %11 = vector.broadcast %c1_i32 : i32 to vector<8x1xi32>
    %12 = arith.cmpi eq, %0, %11 : vector<8x1xi32>
    %13 = vector.shape_cast %12 : vector<8x1xi1> to vector<8x1xi1>
    %14 = vector.broadcast %13 : vector<8x1xi1> to vector<8x4xi1>
    %15 = vector.shape_cast %10 : vector<1x4xf32> to vector<1x4xf32>
    %16 = vector.broadcast %15 : vector<1x4xf32> to vector<8x4xf32>
    %17 = arith.select %14, %16, %9 : vector<8x4xi1>, vector<8x4xf32>
    %c2 = arith.constant 2 : index
    %c0_4 = arith.constant 0 : index
    %18 = vector.load %arg4[%c2, %c0_4] : memref<3x4xf32, #tpu.memory_space<vmem>>, vector<1x4xf32>
    %c2_i32 = arith.constant 2 : i32
    %19 = vector.broadcast %c2_i32 : i32 to vector<8x1xi32>
    %20 = arith.cmpi eq, %0, %19 : vector<8x1xi32>
    %21 = vector.shape_cast %20 : vector<8x1xi1> to vector<8x1xi1>
    %22 = vector.broadcast %21 : vector<8x1xi1> to vector<8x4xi1>
    %23 = vector.shape_cast %18 : vector<1x4xf32> to vector<1x4xf32>
    %24 = vector.broadcast %23 : vector<1x4xf32> to vector<8x4xf32>
    %25 = arith.select %22, %24, %17 : vector<8x4xi1>, vector<8x4xf32>
    %c0_5 = arith.constant 0 : index
    %26 = memref.load %arg1[%c0_5] : memref<1xf32, #tpu.memory_space<smem>>
    %c0_6 = arith.constant 0 : index
    %c0_7 = arith.constant 0 : index
    %27 = vector.load %arg3[%c0_6, %c0_7] : memref<8x4xf32, #tpu.memory_space<vmem>>, vector<8x4xf32>
    %28 = arith.addf %25, %27 : vector<8x4xf32>
    %29 = vector.broadcast %26 : f32 to vector<8x4xf32>
    %30 = arith.mulf %28, %29 : vector<8x4xf32>
    %cst_8 = arith.constant dense<0xFF800000> : vector<8xf32>
    %31 = vector.multi_reduction <maximumf>, %30, %cst_8 [1] : vector<8x4xf32> to vector<8xf32>
    %32 = vector.shape_cast %31 : vector<8xf32> to vector<8x1xf32>
    %33 = vector.broadcast %32 : vector<8x1xf32> to vector<8x4xf32>
    %34 = arith.subf %30, %33 : vector<8x4xf32>
    %35 = math.exp %34 : vector<8x4xf32>
    %cst_9 = arith.constant dense<0.000000e+00> : vector<8xf32>
    %36 = vector.multi_reduction <add>, %35, %cst_9 [1] : vector<8x4xf32> to vector<8xf32>
    %37 = vector.shape_cast %36 : vector<8xf32> to vector<8x1xf32>
    %38 = vector.broadcast %37 : vector<8x1xf32> to vector<8x4xf32>
    %39 = arith.divf %35, %38 : vector<8x4xf32>
    %c0_10 = arith.constant 0 : index
    %c0_11 = arith.constant 0 : index
    %40 = vector.load %arg5[%c0_10, %c0_11] : memref<8x4xf32, #tpu.memory_space<vmem>>, vector<8x4xf32>
    tpu.vector_store %arg5[%c0_10, %c0_11], %39 {strides = array<i32>} : memref<8x4xf32, #tpu.memory_space<vmem>>, vector<8x4xf32>,
    return
  }
  func.func @transform_0(%arg0: i32) -> i32 {
    %c0_i32 = arith.constant 0 : i32
    %c0_i32_0 = arith.constant 0 : i32
    return %c0_i32 : i32
  }
  func.func @transform_1(%arg0: i32) -> (i32, i32) {
    %c0_i32 = arith.constant 0 : i32
    %c0_i32_0 = arith.constant 0 : i32
    return %arg0, %c0_i32 : i32, i32
  }
  func.func @transform_2(%arg0: i32) -> (i32, i32) {
    %c0_i32 = arith.constant 0 : i32
    %c0_i32_0 = arith.constant 0 : i32
    return %arg0, %c0_i32 : i32, i32
  }
  func.func @transform_3(%arg0: i32) -> (i32, i32) {
    %c0_i32 = arith.constant 0 : i32
    %c0_i32_0 = arith.constant 0 : i32
    %c0_i32_1 = arith.constant 0 : i32
    return %c0_i32, %c0_i32_0 : i32, i32
  }
  func.func @transform_4(%arg0: i32) -> (i32, i32) {
    %c0_i32 = arith.constant 0 : i32
    %c0_i32_0 = arith.constant 0 : i32
    return %arg0, %c0_i32 : i32, i32
  }
}

</mosaic_0001>

<llo_original>
// kernel: _branching_apply.1
$region0: #{_branching_apply.1}
  #allocation0 [shape = 'u32[]', space=smem, size = 0x4, offset = 0x4, fixed_abs, tag = 'smem constant byte address 0x4 - core index']
  #allocation1 [shape = 'u32[144,128]{1,0:T(1,128)}', space=vmem, size = 0x12000, scoped, tag = 'internal scratch']
  #allocation2 [shape = 'f32[1]{0:T(128)S(6)}', space=smem, size = 0x200, scoped, tag = 'scoped memory for _branching_apply.1']
  %s0 = inlined_call_operand.<no memory space> [shape: f32[1], index: 0, kind: input, shape index: {}]
  %s1 = inlined_call_operand.vmem [shape: s32[8,1], index: 1, kind: input, shape index: {}]
  %s2 = inlined_call_operand.vmem [shape: f32[8,4], index: 2, kind: input, shape index: {}]
  %s3 = inlined_call_operand.vmem [shape: f32[3,4], index: 3, kind: input, shape index: {}]
  %s4 = inlined_call_operand.vmem [shape: f32[8,4], index: 4, kind: output, shape index: {}]
  %s5 = sld [smem:[#allocation0]]
  $region26: #{_branching_apply.1} parent=0
    _
  %s7 = ssub.s32 1, %s5
  %s8 = scalar_select 0, %s7, %s5
  %9 = sst [smem:[#allocation2]] %s0
  // Predicated region
  $region2: #{_branching_apply.1} parent=0 // pred_check
    _
  $region3: #{_branching_apply.1} parent=0 // pred_check_branch
    %11 = sbr.rel (0) target = $region5
  $region4: #{_branching_apply.1} parent=0 // pred_region
    _
  $region5: #{_branching_apply.1} parent=0 // pred_fallthru
    _
  // Predicated region
  $region6: #{_branching_apply.1} parent=0 // pred_check
    _
  $region7: #{_branching_apply.1} parent=0 // pred_check_branch
    %13 = sbr.rel (0) target = $region9
  $region8: #{_branching_apply.1} parent=0 // pred_region
    _
  $region9: #{_branching_apply.1} parent=0 // pred_fallthru
    _
  // Predicated region
  $region10: #{_branching_apply.1} parent=0 // pred_check
    _
  $region11: #{_branching_apply.1} parent=0 // pred_check_branch
    %15 = sbr.rel (0) target = $region13
  $region12: #{_branching_apply.1} parent=0 // pred_region
    _
  $region13: #{_branching_apply.1} parent=0 // pred_fallthru
    _
  // Predicated region
  $region14: #{_branching_apply.1} parent=0 // pred_check
    _
  $region15: #{_branching_apply.1} parent=0 // pred_check_branch
    %17 = sbr.rel (0) target = $region17
  $region16: #{_branching_apply.1} parent=0 // pred_region
    _
  $region17: #{_branching_apply.1} parent=0 // pred_fallthru
    _
  %v18 = vld [vmem:[%s1] sm:$0xff]
  %v19 = vld [vmem:[%s3] sm:$0x1]
  %vm20 = vcmp.eq.s32.totalorder %v18, 0
  %v21 = vsel %vm20, 1, 0
  %22 = vset.pattern.permute.xlu0 0
  %23 = vperm.xlu0 %22, %v21
  %v24 = vpop.permute.xlu0 %23
  %vm25 = vcmp.eq.s32.totalorder %v24, 1
  %v26 = vlaneseq
  %v27 = vshrl.u32 %v26, 7
  %v28 = vsub.s32 0, %v27
  %v29 = vrot.slane %v19, %v28
  %v30 = vsel %vm25, %v29, 0.0
  %v31 = vld [vmem:[%s3 + $0x1] sm:$0x1]
  %vm32 = vcmp.eq.s32.totalorder %v18, 1
  %v33 = vsel %vm32, 1, 0
  %34 = vset.pattern.permute.xlu0 0
  %35 = vperm.xlu0 %34, %v33
  %v36 = vpop.permute.xlu0 %35
  %vm37 = vcmp.eq.s32.totalorder %v36, 1
  %v38 = vlaneseq
  %v39 = vshrl.u32 %v38, 7
  %v40 = vsub.s32 0, %v39
  %v41 = vrot.slane %v31, %v40
  %v42 = vsel %vm37, %v41, %v30
  %v43 = vld [vmem:[%s3 + $0x2] sm:$0x1]
  %vm44 = vcmp.eq.s32.totalorder %v18, 2
  %v45 = vsel %vm44, 1, 0
  %46 = vset.pattern.permute.xlu0 0
  %47 = vperm.xlu0 %46, %v45
  %v48 = vpop.permute.xlu0 %47
  %vm49 = vcmp.eq.s32.totalorder %v48, 1
  %v50 = vlaneseq
  %v51 = vshrl.u32 %v50, 7
  %v52 = vsub.s32 0, %v51
  %v53 = vrot.slane %v43, %v52
  %v54 = vsel %vm49, %v53, %v42
  %s55 = sld [smem:[#allocation2]]
  %v56 = vld [vmem:[%s2] sm:$0xff]
  %v57 = vadd.f32 %v54, %v56
  %v58 = vstv %s55
  %v59 = vmul.f32 %v57, %v58
  %vm60 = vcmask 31744
  %v61 = vsel %vm60, %v59, -inf
  %62 = vmax.xlane.f32.xlu0 %v61
  %v63 = vpop.xlane.xlu0 %62
  %v64 = vsub.f32 %v59, %v63
  %v65 = vmul.f32 %v64, 1.442695
  %v66 = vpow.pop %v65
  %v67 = vsel %vm60, %v66, 0.0
  %68 = vadd.xlane.f32.xlu0 %v67
  %v69 = vpop.xlane.xlu0 %68
  %v70 = vrcp.pop %v69
  %v71 = vmul.f32 %v66, %v70
  %72 = vst.msk [vmem:[%s4] sm:$0xff] %vm60, %v71
  // Predicated region
  $region18: #{_branching_apply.1} parent=0 // pred_check
    _
  $region19: #{_branching_apply.1} parent=0 // pred_check_branch
    %74 = sbr.rel (0) target = $region21
  $region20: #{_branching_apply.1} parent=0 // pred_region
    _
  $region21: #{_branching_apply.1} parent=0 // pred_fallthru
    _
  // Predicated region
  $region22: #{_branching_apply.1} parent=0 // pred_check
    _
  $region23: #{_branching_apply.1} parent=0 // pred_check_branch
    %76 = sbr.rel (0) target = $region25
  $region24: #{_branching_apply.1} parent=0 // pred_region
    _
  $region25: #{_branching_apply.1} parent=0 // pred_fallthru
    _

</llo_original>
